<compile_context>
chip_gen: v5e
topology: v5e:2x2
jax: 0.10.0
libtpu: 0.0.40
codegen_flags: <defaults>
</compile_context>

<pallas_src>
import jax
import jax.numpy as jnp
from jax.experimental import pallas as pl
from jax.experimental.pallas import tpu as pltpu

EPS = 1e-5
HIDDEN = 512
LANE = 128
SUBLANE = 8
MAX_TB = 2048


def _round_up(x, m):
    return (x + m - 1) // m * m


# ---------------------------------------------------------------------------
# Kernel
# ---------------------------------------------------------------------------
def basic_block_kernel(x_ref, w1_ref, c1_ref, w2_ref, c2_ref, o_ref):
    """Two fused (matmul + bias + ReLU6) stages.

    Eval-mode BatchNorm is pre-folded into w1/c1 and w2/c2; Dropout is identity.
    Weights are bf16, activations are cast to bf16 only at the MXU boundary,
    accumulation and elementwise math are f32; final store uses o_ref.dtype.
    """
    x = x_ref[...]                                                   # (TB, d_in)

    # --- folded BN1 + Linear(d_in, 512) + ReLU6 ---
    z1 = jnp.dot(x.astype(w1_ref.dtype), w1_ref[...],
                 preferred_element_type=jnp.float32) + c1_ref[...]
    a1 = jnp.clip(z1, 0.0, 6.0)

    # --- folded BN2 + Linear(512, d_out) + ReLU6 ---
    z2 = jnp.dot(a1.astype(w2_ref.dtype), w2_ref[...],
                 preferred_element_type=jnp.float32) + c2_ref[...]
    o_ref[...] = jnp.clip(z2, 0.0, 6.0).astype(o_ref.dtype)


# ---------------------------------------------------------------------------
# One-time parameter transform: fold eval-mode BN into the Linears, bf16 weights.
# ---------------------------------------------------------------------------
def fold_params(p, *, weight_dtype=jnp.bfloat16):
    scale1 = p["g1"] * jax.lax.rsqrt(p["v1"] + EPS)          # (1, d_in)
    shift1 = p["b1"] - p["m1"] * scale1                      # (1, d_in)
    w1 = scale1.reshape(-1, 1) * p["w1"]                     # (d_in, 512)
    c1 = p["c1"] + shift1 @ p["w1"]                          # (1, 512)

    scale2 = p["g2"] * jax.lax.rsqrt(p["v2"] + EPS)          # (1, 512)
    shift2 = p["b2"] - p["m2"] * scale2                      # (1, 512)
    w2 = scale2.reshape(-1, 1) * p["w2"]                     # (512, d_out)
    c2 = p["c2"] + shift2 @ p["w2"]                          # (1, d_out)

    return {
        "w1": w1.astype(weight_dtype),
        "c1": c1.astype(jnp.float32),
        "w2": w2.astype(weight_dtype),
        "c2": c2.astype(jnp.float32),
    }


# ---------------------------------------------------------------------------
# Per-generation VMEM budget and batch-tile sizing
# ---------------------------------------------------------------------------
def _vmem_budget():
    cap = 64 * 1024 * 1024                      # conservative fallback (v7x per-TC)
    try:
        info = pltpu.get_tpu_info()
        cap = int(getattr(info, "vmem_capacity_bytes", cap)) or cap
    except Exception:
        pass
    # ~112 MiB on 128 MiB parts (v5e/v6e), ~56 MiB on 64 MiB parts (v7x).
    return min(int(cap * 0.875), cap - 8 * 1024 * 1024)


def _pick_batch_tile(B, d_in, d_out, x_itemsize, out_itemsize, vmem_budget):
    # VMEM bytes per batch row: double-buffered x + out tiles, one f32 hidden
    # activation and one f32 stage-2 accumulator (compiler temporaries).
    per_row = 2 * d_in * x_itemsize + 2 * d_out * out_itemsize + HIDDEN * 4 + d_out * 4
    # Weights/biases, counted double-buffered in case single-buffering is not
    # honored by this jax version (worst case).
    wbytes = 2 * ((d_in * HIDDEN + HIDDEN * d_out) * 2 + (HIDDEN + d_out) * 4)
    avail = vmem_budget - wbytes - 4 * 1024 * 1024          # headroom for scratch
    tb = max(avail // per_row, LANE)
    tb = min((tb // LANE) * LANE, MAX_TB)                    # 128-aligned, capped

    if B <= LANE:
        # Tiny batch: a single exact (sublane-aligned) block; splitting only
        # adds per-step overhead.
        return int(_round_up(max(B, 1), SUBLANE))

    tb = min(tb, _round_up(B, LANE))
    # v7x megacore: guarantee >= 2 grid steps so both TensorCores get work.
    if tb >= B:
        tb = max(LANE, _round_up((B + 1) // 2, LANE))
    return int(tb)


# ---------------------------------------------------------------------------
# Wrapper
# ---------------------------------------------------------------------------
def basic_block(x, folded, *, out_dtype=None):
    """x: (B, d_in) float32 or bfloat16.  folded: output of fold_params().

    out_dtype defaults to x.dtype (so a bf16 producer gets a bf16 output and
    both streamed DMAs are halved); pass jnp.float32 to force an f32 result.
    """
    B, d_in = x.shape
    w1, c1, w2, c2 = folded["w1"], folded["c1"], folded["w2"], folded["c2"]
    d_out = w2.shape[1]
    if out_dtype is None:
        out_dtype = x.dtype
    out_itemsize = jnp.dtype(out_dtype).itemsize

    vmem_budget = _vmem_budget()
    tb = _pick_batch_tile(B, d_in, d_out, x.dtype.itemsize, out_itemsize, vmem_budget)
    grid = (pl.cdiv(B, tb),)

    cost = pl.CostEstimate(
        flops=2 * B * (d_in * HIDDEN + HIDDEN * d_out),
        transcendentals=0,
        bytes_accessed=(B * d_in * x.dtype.itemsize
                        + B * d_out * out_itemsize
                        + w1.size * w1.dtype.itemsize
                        + w2.size * w2.dtype.itemsize
                        + c1.size * 4 + c2.size * 4),
    )

    def build(single_buffer_weights):
        wmode = dict(pipeline_mode=pl.Buffered(1)) if single_buffer_weights else {}
        return pl.pallas_call(
            basic_block_kernel,
            out_shape=jax.ShapeDtypeStruct((B, d_out), out_dtype),
            grid=grid,
            in_specs=[
                pl.BlockSpec((tb, d_in), lambda i: (i, 0)),              # x: streamed per tile
                pl.BlockSpec((d_in, HIDDEN), lambda i: (0, 0), **wmode),  # w1: VMEM-resident
                pl.BlockSpec((1, HIDDEN), lambda i: (0, 0), **wmode),     # c1
                pl.BlockSpec((HIDDEN, d_out), lambda i: (0, 0), **wmode), # w2
                pl.BlockSpec((1, d_out), lambda i: (0, 0), **wmode),      # c2
            ],
            # Unpadded d_out, ragged boundary block handled by Pallas masking
            # (OOB rows of the last block are never written back to HBM).
            out_specs=pl.BlockSpec((tb, d_out), lambda i: (i, 0)),
            compiler_params=pltpu.CompilerParams(
                dimension_semantics=("parallel",),          # megacore sharding on v7x
                vmem_limit_bytes=vmem_budget,
            ),
            cost_estimate=cost,
        )

    try:
        return build(True)(x, w1, c1, w2, c2)
    except Exception:
        # Fallback: this jax version rejects pipeline_mode / pl.Buffered(1) on
        # grid-pipelined BlockSpecs; constant index_maps still avoid re-DMA.
        return build(False)(x, w1, c1, w2, c2)


# ---------------------------------------------------------------------------
# Synthetic module parameters + references
# ---------------------------------------------------------------------------
def init_params(key, input_dim, output_dim):
    """Deterministic synthetic parameters matching the PyTorch module shapes."""
    ks = jax.random.split(key, 10)
    return {
        # BatchNorm1d(input_dim): weight, bias, running_mean, running_var
        "g1": jax.random.normal(ks[0], (1, input_dim), jnp.float32) * 0.1 + 1.0,
        "b1": jax.random.normal(ks[1], (1, input_dim), jnp.float32) * 0.1,
        "m1": jax.random.normal(ks[2], (1, input_dim), jnp.float32) * 0.1,
        "v1": jax.random.uniform(ks[3], (1, input_dim), jnp.float32, 0.5, 1.5),
        # Linear(input_dim, 512): stored pre-transposed as (input_dim, 512)
        "w1": jax.random.normal(ks[4], (input_dim, HIDDEN), jnp.float32)
              * (1.0 / jnp.sqrt(input_dim)),
        "c1": jax.random.normal(ks[5], (1, HIDDEN), jnp.float32) * 0.01,
        # BatchNorm1d(512)
        "g2": jax.random.normal(ks[6], (1, HIDDEN), jnp.float32) * 0.1 + 1.0,
        "b2": jax.random.normal(ks[7], (1, HIDDEN), jnp.float32) * 0.1,
        "m2": jax.random.normal(ks[8], (1, HIDDEN), jnp.float32) * 0.1,
        "v2": jax.random.uniform(ks[9], (1, HIDDEN), jnp.float32, 0.5, 1.5),
        # Linear(512, output_dim): stored pre-transposed as (512, output_dim)
        "w2": jax.random.normal(jax.random.fold_in(key, 100),
                                (HIDDEN, output_dim), jnp.float32)
              * (1.0 / jnp.sqrt(HIDDEN)),
        "c2": jax.random.normal(jax.random.fold_in(key, 101),
                                (1, output_dim), jnp.float32) * 0.01,
    }


def basic_block_ref(x, p):
    """Exact eval-mode module math in f32 (no folding, no bf16)."""
    h = (x - p["m1"]) / jnp.sqrt(p["v1"] + EPS) * p["g1"] + p["b1"]
    a1 = jnp.clip(h @ p["w1"] + p["c1"], 0.0, 6.0)
    h2 = (a1 - p["m2"]) / jnp.sqrt(p["v2"] + EPS) * p["g2"] + p["b2"]
    return jnp.clip(h2 @ p["w2"] + p["c2"], 0.0, 6.0)


def basic_block_folded_ref(x, folded):
    """Pure-JAX replica of the kernel's folded/bf16 math (tight-tolerance check)."""
    w1, w2 = folded["w1"], folded["w2"]
    z1 = jnp.dot(x.astype(w1.dtype), w1,
                 preferred_element_type=jnp.float32) + folded["c1"]
    a1 = jnp.clip(z1, 0.0, 6.0)
    z2 = jnp.dot(a1.astype(w2.dtype), w2,
                 preferred_element_type=jnp.float32) + folded["c2"]
    return jnp.clip(z2, 0.0, 6.0)


if __name__ == "__main__":
    key = jax.random.PRNGKey(0)
    k_x, k_p = jax.random.split(key)

    B, input_dim, output_dim = 8, 32, 16
    x = jax.random.normal(k_x, (B, input_dim), jnp.float32)
    params = init_params(k_p, input_dim, output_dim)
    folded = fold_params(params)          # one-time weight transform (BN fold + bf16)

    out = jax.block_until_ready(basic_block(x, folded, out_dtype=jnp.float32))
    assert out.shape == (B, output_dim)

    # Tight check against identical folded/bf16 math.
    ref_folded = basic_block_folded_ref(x, folded)
    assert jnp.allclose(out, ref_folded, atol=1e-3, rtol=1e-3), "mismatch vs folded reference"

    # Loose check against the exact f32 eval-mode module (bf16 weight quantization).
    ref_f32 = basic_block_ref(x, params)
    assert jnp.allclose(out, ref_f32, atol=5e-2, rtol=5e-2), "mismatch vs f32 module reference"

    # Ragged batch (B not a multiple of the tile): exercises the masked
    # boundary block path that replaced the wrapper-side pad/slice passes.
    B2 = 13
    x2 = jax.random.normal(jax.random.fold_in(key, 7), (B2, input_dim), jnp.float32)
    out2 = jax.block_until_ready(basic_block(x2, folded, out_dtype=jnp.float32))
    assert out2.shape == (B2, output_dim)
    assert jnp.allclose(out2, basic_block_folded_ref(x2, folded),
                        atol=1e-3, rtol=1e-3), "mismatch on ragged batch"

    print("KERNEL_OK")
</pallas_src>

<mosaic_0001>
module attributes {stable_mosaic.version = 11 : i64} {
  func.func @basic_block_kernel(%arg0: i32, %arg1: memref<8x32xf32, #tpu.memory_space<vmem>>, %arg2: memref<32x512xbf16, #tpu.memory_space<vmem>>, %arg3: memref<1x512xf32, #tpu.memory_space<vmem>>, %arg4: memref<512x16xbf16, #tpu.memory_space<vmem>>, %arg5: memref<1x16xf32, #tpu.memory_space<vmem>>, %arg6: memref<8x16xf32, #tpu.memory_space<vmem>>) attributes {dimension_semantics = [#tpu.dimension_semantics<parallel>], iteration_bounds = array<i64: 1>, scalar_prefetch = 0 : i64, scratch_operands = 0 : i64, tpu.core_type = #tpu.core_type<tc>, window_params = [{transform_indices = @transform_0, window_bounds = array<i64: 8, 32>}, {pipeline_mode = #tpu.pipeline_mode<synchronous>, transform_indices = @transform_1, window_bounds = array<i64: 32, 512>}, {pipeline_mode = #tpu.pipeline_mode<synchronous>, transform_indices = @transform_2, window_bounds = array<i64: 1, 512>}, {pipeline_mode = #tpu.pipeline_mode<synchronous>, transform_indices = @transform_3, window_bounds = array<i64: 512, 16>}, {pipeline_mode = #tpu.pipeline_mode<synchronous>, transform_indices = @transform_4, window_bounds = array<i64: 1, 16>}, {transform_indices = @transform_5, window_bounds = array<i64: 8, 16>}]} {
    %c0 = arith.constant 0 : index
    %c0_0 = arith.constant 0 : index
    %0 = vector.load %arg1[%c0, %c0_0] : memref<8x32xf32, #tpu.memory_space<vmem>>, vector<8x32xf32>
    %1 = arith.truncf %0 : vector<8x32xf32> to vector<8x32xbf16>
    %c0_1 = arith.constant 0 : index
    %c0_2 = arith.constant 0 : index
    %2 = vector.load %arg2[%c0_1, %c0_2] : memref<32x512xbf16, #tpu.memory_space<vmem>>, vector<32x512xbf16>
    %cst = arith.constant dense<0.000000e+00> : vector<8x512xf32>
    %3 = tpu.matmul %1, %2, %cst {dimension_numbers = #tpu.dot_dimension_numbers<[1], [0], [0], [1], [0, 0, 1, 1], [], []>} : vector<8x32xbf16>, vector<32x512xbf16>, vector<8x512xf32> -> vector<8x512xf32>
    %c0_3 = arith.constant 0 : index
    %c0_4 = arith.constant 0 : index
    %4 = vector.load %arg3[%c0_3, %c0_4] : memref<1x512xf32, #tpu.memory_space<vmem>>, vector<1x512xf32>
    %5 = vector.broadcast %4 : vector<1x512xf32> to vector<8x512xf32>
    %6 = arith.addf %3, %5 : vector<8x512xf32>
    %cst_5 = arith.constant 0.000000e+00 : f32
    %cst_6 = arith.constant 6.000000e+00 : f32
    %7 = vector.broadcast %cst_5 : f32 to vector<8x512xf32>
    %8 = arith.maximumf %7, %6 : vector<8x512xf32>
    %9 = vector.broadcast %cst_6 : f32 to vector<8x512xf32>
    %10 = arith.minimumf %9, %8 : vector<8x512xf32>
    %11 = arith.truncf %10 : vector<8x512xf32> to vector<8x512xbf16>
    %c0_7 = arith.constant 0 : index
    %c0_8 = arith.constant 0 : index
    %12 = vector.load %arg4[%c0_7, %c0_8] : memref<512x16xbf16, #tpu.memory_space<vmem>>, vector<512x16xbf16>
    %cst_9 = arith.constant dense<0.000000e+00> : vector<8x16xf32>
    %13 = tpu.matmul %11, %12, %cst_9 {dimension_numbers = #tpu.dot_dimension_numbers<[1], [0], [0], [1], [0, 0, 1, 1], [], []>} : vector<8x512xbf16>, vector<512x16xbf16>, vector<8x16xf32> -> vector<8x16xf32>
    %c0_10 = arith.constant 0 : index
    %c0_11 = arith.constant 0 : index
    %14 = vector.load %arg5[%c0_10, %c0_11] : memref<1x16xf32, #tpu.memory_space<vmem>>, vector<1x16xf32>
    %15 = vector.broadcast %14 : vector<1x16xf32> to vector<8x16xf32>
    %16 = arith.addf %13, %15 : vector<8x16xf32>
    %cst_12 = arith.constant 0.000000e+00 : f32
    %cst_13 = arith.constant 6.000000e+00 : f32
    %17 = vector.broadcast %cst_12 : f32 to vector<8x16xf32>
    %18 = arith.maximumf %17, %16 : vector<8x16xf32>
    %19 = vector.broadcast %cst_13 : f32 to vector<8x16xf32>
    %20 = arith.minimumf %19, %18 : vector<8x16xf32>
    %c0_14 = arith.constant 0 : index
    %c0_15 = arith.constant 0 : index
    %21 = vector.load %arg6[%c0_14, %c0_15] : memref<8x16xf32, #tpu.memory_space<vmem>>, vector<8x16xf32>
    tpu.vector_store %arg6[%c0_14, %c0_15], %20 {strides = array<i32>} : memref<8x16xf32, #tpu.memory_space<vmem>>, vector<8x16xf32>,
    return
  }
  func.func @transform_0(%arg0: i32) -> (i32, i32) {
    %c0_i32 = arith.constant 0 : i32
    %c0_i32_0 = arith.constant 0 : i32
    return %arg0, %c0_i32 : i32, i32
  }
  func.func @transform_1(%arg0: i32) -> (i32, i32) {
    %c0_i32 = arith.constant 0 : i32
    %c0_i32_0 = arith.constant 0 : i32
    %c0_i32_1 = arith.constant 0 : i32
    return %c0_i32, %c0_i32_0 : i32, i32
  }
  func.func @transform_2(%arg0: i32) -> (i32, i32) {
    %c0_i32 = arith.constant 0 : i32
    %c0_i32_0 = arith.constant 0 : i32
    %c0_i32_1 = arith.constant 0 : i32
    return %c0_i32, %c0_i32_0 : i32, i32
  }
  func.func @transform_3(%arg0: i32) -> (i32, i32) {
    %c0_i32 = arith.constant 0 : i32
    %c0_i32_0 = arith.constant 0 : i32
    %c0_i32_1 = arith.constant 0 : i32
    return %c0_i32, %c0_i32_0 : i32, i32
  }
  func.func @transform_4(%arg0: i32) -> (i32, i32) {
    %c0_i32 = arith.constant 0 : i32
    %c0_i32_0 = arith.constant 0 : i32
    %c0_i32_1 = arith.constant 0 : i32
    return %c0_i32, %c0_i32_0 : i32, i32
  }
  func.func @transform_5(%arg0: i32) -> (i32, i32) {
    %c0_i32 = arith.constant 0 : i32
    %c0_i32_0 = arith.constant 0 : i32
    return %arg0, %c0_i32 : i32, i32
  }
}

module attributes {stable_mosaic.version = 11 : i64} {
  func.func @basic_block_kernel(%arg0: i32, %arg1: memref<8x32xf32, #tpu.memory_space<vmem>>, %arg2: memref<32x512xbf16, #tpu.memory_space<vmem>>, %arg3: memref<1x512xf32, #tpu.memory_space<vmem>>, %arg4: memref<512x16xbf16, #tpu.memory_space<vmem>>, %arg5: memref<1x16xf32, #tpu.memory_space<vmem>>, %arg6: memref<8x16xf32, #tpu.memory_space<vmem>>) attributes {dimension_semantics = [#tpu.dimension_semantics<parallel>], iteration_bounds = array<i64: 1>, scalar_prefetch = 0 : i64, scratch_operands = 0 : i64, tpu.core_type = #tpu.core_type<tc>, window_params = [{transform_indices = @transform_0, window_bounds = array<i64: 8, 32>}, {pipeline_mode = #tpu.pipeline_mode<synchronous>, transform_indices = @transform_1, window_bounds = array<i64: 32, 512>}, {pipeline_mode = #tpu.pipeline_mode<synchronous>, transform_indices = @transform_2, window_bounds = array<i64: 1, 512>}, {pipeline_mode = #tpu.pipeline_mode<synchronous>, transform_indices = @transform_3, window_bounds = array<i64: 512, 16>}, {pipeline_mode = #tpu.pipeline_mode<synchronous>, transform_indices = @transform_4, window_bounds = array<i64: 1, 16>}, {transform_indices = @transform_5, window_bounds = array<i64: 8, 16>}]} {
    %c0 = arith.constant 0 : index
    %c0_0 = arith.constant 0 : index
    %0 = vector.load %arg1[%c0, %c0_0] : memref<8x32xf32, #tpu.memory_space<vmem>>, vector<8x32xf32>
    %1 = arith.truncf %0 : vector<8x32xf32> to vector<8x32xbf16>
    %c0_1 = arith.constant 0 : index
    %c0_2 = arith.constant 0 : index
    %2 = vector.load %arg2[%c0_1, %c0_2] : memref<32x512xbf16, #tpu.memory_space<vmem>>, vector<32x512xbf16>
    %cst = arith.constant dense<0.000000e+00> : vector<8x512xf32>
    %3 = tpu.matmul %1, %2, %cst {dimension_numbers = #tpu.dot_dimension_numbers<[1], [0], [0], [1], [0, 0, 1, 1], [], []>} : vector<8x32xbf16>, vector<32x512xbf16>, vector<8x512xf32> -> vector<8x512xf32>
    %c0_3 = arith.constant 0 : index
    %c0_4 = arith.constant 0 : index
    %4 = vector.load %arg3[%c0_3, %c0_4] : memref<1x512xf32, #tpu.memory_space<vmem>>, vector<1x512xf32>
    %5 = vector.broadcast %4 : vector<1x512xf32> to vector<8x512xf32>
    %6 = arith.addf %3, %5 : vector<8x512xf32>
    %cst_5 = arith.constant 0.000000e+00 : f32
    %cst_6 = arith.constant 6.000000e+00 : f32
    %7 = vector.broadcast %cst_5 : f32 to vector<8x512xf32>
    %8 = arith.maximumf %7, %6 : vector<8x512xf32>
    %9 = vector.broadcast %cst_6 : f32 to vector<8x512xf32>
    %10 = arith.minimumf %9, %8 : vector<8x512xf32>
    %11 = arith.truncf %10 : vector<8x512xf32> to vector<8x512xbf16>
    %c0_7 = arith.constant 0 : index
    %c0_8 = arith.constant 0 : index
    %12 = vector.load %arg4[%c0_7, %c0_8] : memref<512x16xbf16, #tpu.memory_space<vmem>>, vector<512x16xbf16>
    %cst_9 = arith.constant dense<0.000000e+00> : vector<8x16xf32>
    %13 = tpu.matmul %11, %12, %cst_9 {dimension_numbers = #tpu.dot_dimension_numbers<[1], [0], [0], [1], [0, 0, 1, 1], [], []>} : vector<8x512xbf16>, vector<512x16xbf16>, vector<8x16xf32> -> vector<8x16xf32>
    %c0_10 = arith.constant 0 : index
    %c0_11 = arith.constant 0 : index
    %14 = vector.load %arg5[%c0_10, %c0_11] : memref<1x16xf32, #tpu.memory_space<vmem>>, vector<1x16xf32>
    %15 = vector.broadcast %14 : vector<1x16xf32> to vector<8x16xf32>
    %16 = arith.addf %13, %15 : vector<8x16xf32>
    %cst_12 = arith.constant 0.000000e+00 : f32
    %cst_13 = arith.constant 6.000000e+00 : f32
    %17 = vector.broadcast %cst_12 : f32 to vector<8x16xf32>
    %18 = arith.maximumf %17, %16 : vector<8x16xf32>
    %19 = vector.broadcast %cst_13 : f32 to vector<8x16xf32>
    %20 = arith.minimumf %19, %18 : vector<8x16xf32>
    %c0_14 = arith.constant 0 : index
    %c0_15 = arith.constant 0 : index
    %21 = vector.load %arg6[%c0_14, %c0_15] : memref<8x16xf32, #tpu.memory_space<vmem>>, vector<8x16xf32>
    tpu.vector_store %arg6[%c0_14, %c0_15], %20 {strides = array<i32>} : memref<8x16xf32, #tpu.memory_space<vmem>>, vector<8x16xf32>,
    return
  }
  func.func @transform_0(%arg0: i32) -> (i32, i32) {
    %c0_i32 = arith.constant 0 : i32
    %c0_i32_0 = arith.constant 0 : i32
    return %arg0, %c0_i32 : i32, i32
  }
  func.func @transform_1(%arg0: i32) -> (i32, i32) {
    %c0_i32 = arith.constant 0 : i32
    %c0_i32_0 = arith.constant 0 : i32
    %c0_i32_1 = arith.constant 0 : i32
    return %c0_i32, %c0_i32_0 : i32, i32
  }
  func.func @transform_2(%arg0: i32) -> (i32, i32) {
    %c0_i32 = arith.constant 0 : i32
    %c0_i32_0 = arith.constant 0 : i32
    %c0_i32_1 = arith.constant 0 : i32
    return %c0_i32, %c0_i32_0 : i32, i32
  }
  func.func @transform_3(%arg0: i32) -> (i32, i32) {
    %c0_i32 = arith.constant 0 : i32
    %c0_i32_0 = arith.constant 0 : i32
    %c0_i32_1 = arith.constant 0 : i32
    return %c0_i32, %c0_i32_0 : i32, i32
  }
  func.func @transform_4(%arg0: i32) -> (i32, i32) {
    %c0_i32 = arith.constant 0 : i32
    %c0_i32_0 = arith.constant 0 : i32
    %c0_i32_1 = arith.constant 0 : i32
    return %c0_i32, %c0_i32_0 : i32, i32
  }
  func.func @transform_5(%arg0: i32) -> (i32, i32) {
    %c0_i32 = arith.constant 0 : i32
    %c0_i32_0 = arith.constant 0 : i32
    return %arg0, %c0_i32 : i32, i32
  }
}

</mosaic_0001>

<llo_original>
// kernel: tpu_custom_call.1
$region0: #{tpu_custom_call.1}
  #allocation0 [shape = 'u32[]', space=smem, size = 0x4, offset = 0x4, fixed_abs, tag = 'smem constant byte address 0x4 - core index']
  #allocation1 [shape = 'u32[72,128]{1,0:T(1,128)}', space=vmem, size = 0x9000, scoped, tag = 'internal scratch']
  %s0 = inlined_call_operand.vmem [shape: f32[8,32], index: 0, kind: input, shape index: {}]
  %s1 = inlined_call_operand.vmem [shape: bf16[32,512], index: 1, kind: input, shape index: {}]
  %s2 = inlined_call_operand.vmem [shape: f32[1,512], index: 2, kind: input, shape index: {}]
  %s3 = inlined_call_operand.vmem [shape: bf16[512,16], index: 3, kind: input, shape index: {}]
  %s4 = inlined_call_operand.vmem [shape: f32[1,16], index: 4, kind: input, shape index: {}]
  %s5 = inlined_call_operand.hbm [shape: f32[8,16], index: 5, kind: output, shape index: {}]
  %s6 = sld [smem:[#allocation0]]
  $region30: #{tpu_custom_call.1} parent=0
    _
  %s8 = ssub.s32 1, %s6
  %s9 = scalar_select 0, %s8, %s6
  $region1: #{tpu_custom_call.1} parent=0
    #allocation2 [shape = 'u8[4096]{0}', space=vmem, size = 0x1000, scoped, tag = 'output window, operand 0, single buffered']
    #allocation3 [shape = 's32[1]{0}', space=sflag, size = 0x4, scoped, tag = 'scoped memory for tpu_custom_call.1']
    %10 = vsyncpa [#allocation3], 0
    // Predicated region
    $region2: #{tpu_custom_call.1} parent=1 // pred_check
      _
    $region3: #{tpu_custom_call.1} parent=1 // pred_check_branch
      %12 = sbr.rel (0) target = $region5
    $region4: #{tpu_custom_call.1} parent=1 // pred_region
      _
    $region5: #{tpu_custom_call.1} parent=1 // pred_fallthru
      _
    // Predicated region
    $region6: #{tpu_custom_call.1} parent=1 // pred_check
      _
    $region7: #{tpu_custom_call.1} parent=1 // pred_check_branch
      %14 = sbr.rel (0) target = $region9
    $region8: #{tpu_custom_call.1} parent=1 // pred_region
      _
    $region9: #{tpu_custom_call.1} parent=1 // pred_fallthru
      _
    // Predicated region
    $region10: #{tpu_custom_call.1} parent=1 // pred_check
      _
    $region11: #{tpu_custom_call.1} parent=1 // pred_check_branch
      %16 = sbr.rel (0) target = $region13
    $region12: #{tpu_custom_call.1} parent=1 // pred_region
      _
    $region13: #{tpu_custom_call.1} parent=1 // pred_fallthru
      _
    // Predicated region
    $region14: #{tpu_custom_call.1} parent=1 // pred_check
      _
    $region15: #{tpu_custom_call.1} parent=1 // pred_check_branch
      %18 = sbr.rel (0) target = $region17
    $region16: #{tpu_custom_call.1} parent=1 // pred_region
      _
    $region17: #{tpu_custom_call.1} parent=1 // pred_fallthru
      _
    // Predicated region
    $region18: #{tpu_custom_call.1} parent=1 // pred_check
      _
    $region19: #{tpu_custom_call.1} parent=1 // pred_check_branch
      %20 = sbr.rel (0) target = $region21
    $region20: #{tpu_custom_call.1} parent=1 // pred_region
      _
    $region21: #{tpu_custom_call.1} parent=1 // pred_fallthru
      _
    %v22 = vld [vmem:[%s0] sm:$0xff]
    %v23 = vpack.c.bf16 %v22, %v22
    %v24 = vld [vmem:[%s1] sm:$0xff]
    %v25 = vld [vmem:[%s1 + $0x8] sm:$0xff]
    %v26 = vld [vmem:[%s1 + $0x10] sm:$0xff]
    %v27 = vld [vmem:[%s1 + $0x18] sm:$0xff]
    %v28 = vld [vmem:[%s1 + $0x20] sm:$0xff]
    %v29 = vld [vmem:[%s1 + $0x28] sm:$0xff]
    %v30 = vld [vmem:[%s1 + $0x30] sm:$0xff]
    %v31 = vld [vmem:[%s1 + $0x38] sm:$0xff]
    %v32 = vld [vmem:[%s2] sm:$0xf]
    %v34 = vperm.slane %v32, 0
    %v35 = vperm.slane %v32, 1
    %v36 = vperm.slane %v32, 2
    %v37 = vperm.slane %v32, 3
    %v50 = vunpack.c.l.b16 %v24
    %v51 = vunpack.c.h.b16 %v24
    %v52 = vunpack.c.l.b16 %v25
    %v53 = vunpack.c.h.b16 %v25
    %v54 = vunpack.c.l.b16 %v26
    %v55 = vunpack.c.h.b16 %v26
    %v56 = vunpack.c.l.b16 %v27
    %v57 = vunpack.c.h.b16 %v27
    %v58 = vunpack.c.l.b16 %v28
    %v59 = vunpack.c.h.b16 %v28
    %v60 = vunpack.c.l.b16 %v29
    %v61 = vunpack.c.h.b16 %v29
    %v62 = vunpack.c.l.b16 %v30
    %v63 = vunpack.c.h.b16 %v30
    %v64 = vunpack.c.l.b16 %v31
    %v65 = vunpack.c.h.b16 %v31
    %v66 = vpack.c.b16 %v54, %v50
    %v67 = vpack.c.b16 %v55, %v51
    %v68 = vpack.c.b16 %v56, %v52
    %v69 = vpack.c.b16 %v57, %v53
    %v70 = vpack.c.b16 %v62, %v58
    %v71 = vpack.c.b16 %v63, %v59
    %v72 = vpack.c.b16 %v64, %v60
    %v73 = vpack.c.b16 %v65, %v61
    %vm82 = vcmask 261120
    %v84 = vsel %vm82, %v23, 0
    %86 = vmatpush.bf16.msra.mxu0 0
    %87 = vmatpush.bf16.msra.mxu0 0
    %88 = vmatpush.bf16.msra.mxu0 0
    %89 = vmatpush.bf16.msra.mxu0 0
    %90 = vmatpush.bf16.msra.mxu0 0
    %91 = vmatpush.bf16.msra.mxu0 0
    %92 = vmatpush.bf16.msra.mxu0 %v70
    %93 = vmatpush.bf16.msra.mxu0 %v66
    %94 = vmatmul.bf16.gmra.mxu0 %v84
    %v95 = vpop.f32.mrf.mxu0
    %v96 = vadd.f32 %v34, %v95
    %v97 = vpop.f32.mrf.mxu0
    %98 = vdwg.mxu0
    %99 = vmatpush.bf16.msra.mxu0 0
    %100 = vmatpush.bf16.msra.mxu0 0
    %101 = vmatpush.bf16.msra.mxu0 0
    %102 = vmatpush.bf16.msra.mxu0 0
    %103 = vmatpush.bf16.msra.mxu0 0
    %104 = vmatpush.bf16.msra.mxu0 0
    %105 = vmatpush.bf16.msra.mxu0 %v71
    %106 = vmatpush.bf16.msra.mxu0 %v67
    %107 = vmatmul.bf16.gmra.mxu0 %v84
    %v108 = vpop.f32.mrf.mxu0
    %v109 = vadd.f32 %v35, %v108
    %v110 = vpop.f32.mrf.mxu0
    %111 = vdwg.mxu0
    %112 = vmatpush.bf16.msra.mxu0 0
    %113 = vmatpush.bf16.msra.mxu0 0
    %114 = vmatpush.bf16.msra.mxu0 0
    %115 = vmatpush.bf16.msra.mxu0 0
    %116 = vmatpush.bf16.msra.mxu0 0
    %117 = vmatpush.bf16.msra.mxu0 0
    %118 = vmatpush.bf16.msra.mxu0 %v72
    %119 = vmatpush.bf16.msra.mxu0 %v68
    %120 = vmatmul.bf16.gmra.mxu0 %v84
    %v121 = vpop.f32.mrf.mxu0
    %v122 = vadd.f32 %v36, %v121
    %v123 = vpop.f32.mrf.mxu0
    %124 = vdwg.mxu0
    %125 = vmatpush.bf16.msra.mxu0 0
    %126 = vmatpush.bf16.msra.mxu0 0
    %127 = vmatpush.bf16.msra.mxu0 0
    %128 = vmatpush.bf16.msra.mxu0 0
    %129 = vmatpush.bf16.msra.mxu0 0
    %130 = vmatpush.bf16.msra.mxu0 0
    %131 = vmatpush.bf16.msra.mxu0 %v73
    %132 = vmatpush.bf16.msra.mxu0 %v69
    %133 = vmatmul.bf16.gmra.mxu0 %v84
    %v134 = vpop.f32.mrf.mxu0
    %v135 = vadd.f32 %v37, %v134
    %v136 = vpop.f32.mrf.mxu0
    %137 = vdwg.mxu0
    %v138 = vmax.f32 %v96, 0.0
    %v139 = vmax.f32 %v109, 0.0
    %v140 = vmax.f32 %v122, 0.0
    %v141 = vmax.f32 %v135, 0.0
    %v142 = vmin.f32 %v138, 6.0
    %v143 = vmin.f32 %v139, 6.0
    %v144 = vmin.f32 %v140, 6.0
    %v145 = vmin.f32 %v141, 6.0
    %v146 = vpack.c.bf16 %v142, %v142
    %v147 = vpack.c.bf16 %v143, %v143
    %v148 = vpack.c.bf16 %v144, %v144
    %v149 = vpack.c.bf16 %v145, %v145
    %v150 = vld [vmem:[%s3] sm:$0xf]
    %v151 = vld [vmem:[%s3 + $0x4] sm:$0xf]
    %v152 = vld [vmem:[%s3 + $0x8] sm:$0xf]
    %v153 = vld [vmem:[%s3 + $0xc] sm:$0xf]
    %v154 = vld [vmem:[%s3 + $0x10] sm:$0xf]
    %v155 = vld [vmem:[%s3 + $0x14] sm:$0xf]
    %v156 = vld [vmem:[%s3 + $0x18] sm:$0xf]
    %v157 = vld [vmem:[%s3 + $0x1c] sm:$0xf]
    %v158 = vld [vmem:[%s3 + $0x20] sm:$0xf]
    %v159 = vld [vmem:[%s3 + $0x24] sm:$0xf]
    %v160 = vld [vmem:[%s3 + $0x28] sm:$0xf]
    %v161 = vld [vmem:[%s3 + $0x2c] sm:$0xf]
    %v162 = vld [vmem:[%s3 + $0x30] sm:$0xf]
    %v163 = vld [vmem:[%s3 + $0x34] sm:$0xf]
    %v164 = vld [vmem:[%s3 + $0x38] sm:$0xf]
    %v165 = vld [vmem:[%s3 + $0x3c] sm:$0xf]
    %v166 = vld [vmem:[%s3 + $0x40] sm:$0xf]
    %v167 = vld [vmem:[%s3 + $0x44] sm:$0xf]
    %v168 = vld [vmem:[%s3 + $0x48] sm:$0xf]
    %v169 = vld [vmem:[%s3 + $0x4c] sm:$0xf]
    %v170 = vld [vmem:[%s3 + $0x50] sm:$0xf]
    %v171 = vld [vmem:[%s3 + $0x54] sm:$0xf]
    %v172 = vld [vmem:[%s3 + $0x58] sm:$0xf]
    %v173 = vld [vmem:[%s3 + $0x5c] sm:$0xf]
    %v174 = vld [vmem:[%s3 + $0x60] sm:$0xf]
    %v175 = vld [vmem:[%s3 + $0x64] sm:$0xf]
    %v176 = vld [vmem:[%s3 + $0x68] sm:$0xf]
    %v177 = vld [vmem:[%s3 + $0x6c] sm:$0xf]
    %v178 = vld [vmem:[%s3 + $0x70] sm:$0xf]
    %v179 = vld [vmem:[%s3 + $0x74] sm:$0xf]
    %v180 = vld [vmem:[%s3 + $0x78] sm:$0xf]
    %v181 = vld [vmem:[%s3 + $0x7c] sm:$0xf]
    %v182 = vld [vmem:[%s3 + $0x80] sm:$0xf]
    %v183 = vld [vmem:[%s3 + $0x84] sm:$0xf]
    %v184 = vld [vmem:[%s3 + $0x88] sm:$0xf]
    %v185 = vld [vmem:[%s3 + $0x8c] sm:$0xf]
    %v186 = vld [vmem:[%s3 + $0x90] sm:$0xf]
    %v187 = vld [vmem:[%s3 + $0x94] sm:$0xf]
    %v188 = vld [vmem:[%s3 + $0x98] sm:$0xf]
    %v189 = vld [vmem:[%s3 + $0x9c] sm:$0xf]
    %v190 = vld [vmem:[%s3 + $0xa0] sm:$0xf]
    %v191 = vld [vmem:[%s3 + $0xa4] sm:$0xf]
    %v192 = vld [vmem:[%s3 + $0xa8] sm:$0xf]
    %v193 = vld [vmem:[%s3 + $0xac] sm:$0xf]
    %v194 = vld [vmem:[%s3 + $0xb0] sm:$0xf]
    %v195 = vld [vmem:[%s3 + $0xb4] sm:$0xf]
    %v196 = vld [vmem:[%s3 + $0xb8] sm:$0xf]
    %v197 = vld [vmem:[%s3 + $0xbc] sm:$0xf]
    %v198 = vld [vmem:[%s3 + $0xc0] sm:$0xf]
    %v199 = vld [vmem:[%s3 + $0xc4] sm:$0xf]
    %v200 = vld [vmem:[%s3 + $0xc8] sm:$0xf]
    %v201 = vld [vmem:[%s3 + $0xcc] sm:$0xf]
    %v202 = vld [vmem:[%s3 + $0xd0] sm:$0xf]
    %v203 = vld [vmem:[%s3 + $0xd4] sm:$0xf]
    %v204 = vld [vmem:[%s3 + $0xd8] sm:$0xf]
    %v205 = vld [vmem:[%s3 + $0xdc] sm:$0xf]
    %v206 = vld [vmem:[%s3 + $0xe0] sm:$0xf]
    %v207 = vld [vmem:[%s3 + $0xe4] sm:$0xf]
    %v208 = vld [vmem:[%s3 + $0xe8] sm:$0xf]
    %v209 = vld [vmem:[%s3 + $0xec] sm:$0xf]
    %v210 = vld [vmem:[%s3 + $0xf0] sm:$0xf]
    %v211 = vld [vmem:[%s3 + $0xf4] sm:$0xf]
    %v212 = vld [vmem:[%s3 + $0xf8] sm:$0xf]
    %v213 = vld [vmem:[%s3 + $0xfc] sm:$0xf]
    %v214 = vld [vmem:[%s4] sm:$0x1]
    %v216 = vperm.slane %v214, 0
    %v282 = vunpack.c.l.b16 %v150
    %v283 = vunpack.c.l.b16 %v151
    %v284 = vunpack.c.l.b16 %v152
    %v285 = vunpack.c.l.b16 %v153
    %v286 = vunpack.c.l.b16 %v154
    %v287 = vunpack.c.l.b16 %v155
    %v288 = vunpack.c.l.b16 %v156
    %v289 = vunpack.c.l.b16 %v157
    %v290 = vunpack.c.l.b16 %v158
    %v291 = vunpack.c.l.b16 %v159
    %v292 = vunpack.c.l.b16 %v160
    %v293 = vunpack.c.l.b16 %v161
    %v294 = vunpack.c.l.b16 %v162
    %v295 = vunpack.c.l.b16 %v163
    %v296 = vunpack.c.l.b16 %v164
    %v297 = vunpack.c.l.b16 %v165
    %v298 = vunpack.c.l.b16 %v166
    %v299 = vunpack.c.l.b16 %v167
    %v300 = vunpack.c.l.b16 %v168
    %v301 = vunpack.c.l.b16 %v169
    %v302 = vunpack.c.l.b16 %v170
    %v303 = vunpack.c.l.b16 %v171
    %v304 = vunpack.c.l.b16 %v172
    %v305 = vunpack.c.l.b16 %v173
    %v306 = vunpack.c.l.b16 %v174
    %v307 = vunpack.c.l.b16 %v175
    %v308 = vunpack.c.l.b16 %v176
    %v309 = vunpack.c.l.b16 %v177
    %v310 = vunpack.c.l.b16 %v178
    %v311 = vunpack.c.l.b16 %v179
    %v312 = vunpack.c.l.b16 %v180
    %v313 = vunpack.c.l.b16 %v181
    %v314 = vunpack.c.l.b16 %v182
    %v315 = vunpack.c.l.b16 %v183
    %v316 = vunpack.c.l.b16 %v184
    %v317 = vunpack.c.l.b16 %v185
    %v318 = vunpack.c.l.b16 %v186
    %v319 = vunpack.c.l.b16 %v187
    %v320 = vunpack.c.l.b16 %v188
    %v321 = vunpack.c.l.b16 %v189
    %v322 = vunpack.c.l.b16 %v190
    %v323 = vunpack.c.l.b16 %v191
    %v324 = vunpack.c.l.b16 %v192
    %v325 = vunpack.c.l.b16 %v193
    %v326 = vunpack.c.l.b16 %v194
    %v327 = vunpack.c.l.b16 %v195
    %v328 = vunpack.c.l.b16 %v196
    %v329 = vunpack.c.l.b16 %v197
    %v330 = vunpack.c.l.b16 %v198
    %v331 = vunpack.c.l.b16 %v199
    %v332 = vunpack.c.l.b16 %v200
    %v333 = vunpack.c.l.b16 %v201
    %v334 = vunpack.c.l.b16 %v202
    %v335 = vunpack.c.l.b16 %v203
    %v336 = vunpack.c.l.b16 %v204
    %v337 = vunpack.c.l.b16 %v205
    %v338 = vunpack.c.l.b16 %v206
    %v339 = vunpack.c.l.b16 %v207
    %v340 = vunpack.c.l.b16 %v208
    %v341 = vunpack.c.l.b16 %v209
    %v342 = vunpack.c.l.b16 %v210
    %v343 = vunpack.c.l.b16 %v211
    %v344 = vunpack.c.l.b16 %v212
    %v345 = vunpack.c.l.b16 %v213
    %v346 = vpack.c.b16 %v283, %v282
    %v347 = vpack.c.b16 %v285, %v284
    %v348 = vpack.c.b16 %v287, %v286
    %v349 = vpack.c.b16 %v289, %v288
    %v350 = vpack.c.b16 %v291, %v290
    %v351 = vpack.c.b16 %v293, %v292
    %v352 = vpack.c.b16 %v295, %v294
    %v353 = vpack.c.b16 %v297, %v296
    %v354 = vpack.c.b16 %v299, %v298
    %v355 = vpack.c.b16 %v301, %v300
    %v356 = vpack.c.b16 %v303, %v302
    %v357 = vpack.c.b16 %v305, %v304
    %v358 = vpack.c.b16 %v307, %v306
    %v359 = vpack.c.b16 %v309, %v308
    %v360 = vpack.c.b16 %v311, %v310
    %v361 = vpack.c.b16 %v313, %v312
    %v362 = vpack.c.b16 %v315, %v314
    %v363 = vpack.c.b16 %v317, %v316
    %v364 = vpack.c.b16 %v319, %v318
    %v365 = vpack.c.b16 %v321, %v320
    %v366 = vpack.c.b16 %v323, %v322
    %v367 = vpack.c.b16 %v325, %v324
    %v368 = vpack.c.b16 %v327, %v326
    %v369 = vpack.c.b16 %v329, %v328
    %v370 = vpack.c.b16 %v331, %v330
    %v371 = vpack.c.b16 %v333, %v332
    %v372 = vpack.c.b16 %v335, %v334
    %v373 = vpack.c.b16 %v337, %v336
    %v374 = vpack.c.b16 %v339, %v338
    %v375 = vpack.c.b16 %v341, %v340
    %v376 = vpack.c.b16 %v343, %v342
    %v377 = vpack.c.b16 %v345, %v344
    %410 = vmatpush.bf16.msra.mxu0 %v353
    %411 = vmatpush.bf16.msra.mxu0 %v352
    %412 = vmatpush.bf16.msra.mxu0 %v351
    %413 = vmatpush.bf16.msra.mxu0 %v350
    %414 = vmatpush.bf16.msra.mxu0 %v349
    %415 = vmatpush.bf16.msra.mxu0 %v348
    %416 = vmatpush.bf16.msra.mxu0 %v347
    %417 = vmatpush.bf16.msra.mxu0 %v346
    %418 = vmatmul.bf16.gmra.mxu0 %v146
    %v419 = vpop.f32.mrf.mxu0
    %v420 = vadd.f32 %v216, %v419
    %v421 = vpop.f32.mrf.mxu0
    %422 = vdwg.mxu0
    %423 = vmatpush.bf16.msra.mxu0 %v361
    %424 = vmatpush.bf16.msra.mxu0 %v360
    %425 = vmatpush.bf16.msra.mxu0 %v359
    %426 = vmatpush.bf16.msra.mxu0 %v358
    %427 = vmatpush.bf16.msra.mxu0 %v357
    %428 = vmatpush.bf16.msra.mxu0 %v356
    %429 = vmatpush.bf16.msra.mxu0 %v355
    %430 = vmatpush.bf16.msra.mxu0 %v354
    %431 = vmatmul.bf16.gmra.mxu0 %v147
    %v432 = vpop.f32.mrf.mxu0
    %v433 = vadd.f32 %v420, %v432
    %v434 = vpop.f32.mrf.mxu0
    %435 = vdwg.mxu0
    %436 = vmatpush.bf16.msra.mxu0 %v369
    %437 = vmatpush.bf16.msra.mxu0 %v368
    %438 = vmatpush.bf16.msra.mxu0 %v367
    %439 = vmatpush.bf16.msra.mxu0 %v366
    %440 = vmatpush.bf16.msra.mxu0 %v365
    %441 = vmatpush.bf16.msra.mxu0 %v364
    %442 = vmatpush.bf16.msra.mxu0 %v363
    %443 = vmatpush.bf16.msra.mxu0 %v362
    %444 = vmatmul.bf16.gmra.mxu0 %v148
    %v445 = vpop.f32.mrf.mxu0
    %v446 = vadd.f32 %v433, %v445
    %v447 = vpop.f32.mrf.mxu0
    %448 = vdwg.mxu0
    %449 = vmatpush.bf16.msra.mxu0 %v377
    %450 = vmatpush.bf16.msra.mxu0 %v376
    %451 = vmatpush.bf16.msra.mxu0 %v375
    %452 = vmatpush.bf16.msra.mxu0 %v374
    %453 = vmatpush.bf16.msra.mxu0 %v373
    %454 = vmatpush.bf16.msra.mxu0 %v372
    %455 = vmatpush.bf16.msra.mxu0 %v371
    %456 = vmatpush.bf16.msra.mxu0 %v370
    %457 = vmatmul.bf16.gmra.mxu0 %v149
    %v458 = vpop.f32.mrf.mxu0
    %v459 = vadd.f32 %v446, %v458
    %v460 = vpop.f32.mrf.mxu0
    %461 = vdwg.mxu0
    %v462 = vmax.f32 %v459, 0.0
    %v463 = vmin.f32 %v462, 6.0
    %vm464 = vcmask 130048
    %465 = vst.msk [vmem:[#allocation2] sm:$0xff] %vm464, %v463
    // Predicated region
    $region22: #{tpu_custom_call.1} parent=1 // pred_check
      _
    $region23: #{tpu_custom_call.1} parent=1 // pred_check_branch
      %467 = sbr.rel (0) target = $region25
    $region24: #{tpu_custom_call.1} parent=1 // pred_region
      %469 = vsyncadd [#allocation3], 0
      %s471 = sshll.u32 [#allocation2], 4
      %s472 = int_to_ptr.vmem [resolvable:$true] %s471
      %s473 = sshll.u32 %s5, 4
      %s474 = int_to_ptr.hbm [resolvable:$true] %s473
      %476 = dma.vmem_to_hbm [thread:$0]  %s472, 128, %s474, [#allocation3]
    $region25: #{tpu_custom_call.1} parent=1 // pred_fallthru
      _
    // Predicated region
    $region26: #{tpu_custom_call.1} parent=1 // pred_check
      _
    $region27: #{tpu_custom_call.1} parent=1 // pred_check_branch
      %478 = sbr.rel (0) target = $region29
    $region28: #{tpu_custom_call.1} parent=1 // pred_region
      %480 = dma.done [#allocation3], 128
    $region29: #{tpu_custom_call.1} parent=1 // pred_fallthru
      _
    %481 = vsyncpa [#allocation3], 1

// kernel: tpu_custom_call.1
$region0: #{tpu_custom_call.1}
  #allocation0 [shape = 'u32[]', space=smem, size = 0x4, offset = 0x4, fixed_abs, tag = 'smem constant byte address 0x4 - core index']
  #allocation1 [shape = 'u32[72,128]{1,0:T(1,128)}', space=vmem, size = 0x9000, scoped, tag = 'internal scratch']
  %s0 = inlined_call_operand.vmem [shape: f32[8,32], index: 0, kind: input, shape index: {}]
  %s1 = inlined_call_operand.vmem [shape: bf16[32,512], index: 1, kind: input, shape index: {}]
  %s2 = inlined_call_operand.vmem [shape: f32[1,512], index: 2, kind: input, shape index: {}]
  %s3 = inlined_call_operand.vmem [shape: bf16[512,16], index: 3, kind: input, shape index: {}]
  %s4 = inlined_call_operand.vmem [shape: f32[1,16], index: 4, kind: input, shape index: {}]
  %s5 = inlined_call_operand.hbm [shape: f32[8,16], index: 5, kind: output, shape index: {}]
  %s6 = sld [smem:[#allocation0]]
  $region30: #{tpu_custom_call.1} parent=0
    _
  %s8 = ssub.s32 1, %s6
  %s9 = scalar_select 0, %s8, %s6
  $region1: #{tpu_custom_call.1} parent=0
    #allocation2 [shape = 'u8[4096]{0}', space=vmem, size = 0x1000, scoped, tag = 'output window, operand 0, single buffered']
    #allocation3 [shape = 's32[1]{0}', space=sflag, size = 0x4, scoped, tag = 'scoped memory for tpu_custom_call.1']
    %10 = vsyncpa [#allocation3], 0
    // Predicated region
    $region2: #{tpu_custom_call.1} parent=1 // pred_check
      _
    $region3: #{tpu_custom_call.1} parent=1 // pred_check_branch
      %12 = sbr.rel (0) target = $region5
    $region4: #{tpu_custom_call.1} parent=1 // pred_region
      _
    $region5: #{tpu_custom_call.1} parent=1 // pred_fallthru
      _
    // Predicated region
    $region6: #{tpu_custom_call.1} parent=1 // pred_check
      _
    $region7: #{tpu_custom_call.1} parent=1 // pred_check_branch
      %14 = sbr.rel (0) target = $region9
    $region8: #{tpu_custom_call.1} parent=1 // pred_region
      _
    $region9: #{tpu_custom_call.1} parent=1 // pred_fallthru
      _
    // Predicated region
    $region10: #{tpu_custom_call.1} parent=1 // pred_check
      _
    $region11: #{tpu_custom_call.1} parent=1 // pred_check_branch
      %16 = sbr.rel (0) target = $region13
    $region12: #{tpu_custom_call.1} parent=1 // pred_region
      _
    $region13: #{tpu_custom_call.1} parent=1 // pred_fallthru
      _
    // Predicated region
    $region14: #{tpu_custom_call.1} parent=1 // pred_check
      _
    $region15: #{tpu_custom_call.1} parent=1 // pred_check_branch
      %18 = sbr.rel (0) target = $region17
    $region16: #{tpu_custom_call.1} parent=1 // pred_region
      _
    $region17: #{tpu_custom_call.1} parent=1 // pred_fallthru
      _
    // Predicated region
    $region18: #{tpu_custom_call.1} parent=1 // pred_check
      _
    $region19: #{tpu_custom_call.1} parent=1 // pred_check_branch
      %20 = sbr.rel (0) target = $region21
    $region20: #{tpu_custom_call.1} parent=1 // pred_region
      _
    $region21: #{tpu_custom_call.1} parent=1 // pred_fallthru
      _
    %v22 = vld [vmem:[%s0] sm:$0xff]
    %v23 = vpack.c.bf16 %v22, %v22
    %v24 = vld [vmem:[%s1] sm:$0xff]
    %v25 = vld [vmem:[%s1 + $0x8] sm:$0xff]
    %v26 = vld [vmem:[%s1 + $0x10] sm:$0xff]
    %v27 = vld [vmem:[%s1 + $0x18] sm:$0xff]
    %v28 = vld [vmem:[%s1 + $0x20] sm:$0xff]
    %v29 = vld [vmem:[%s1 + $0x28] sm:$0xff]
    %v30 = vld [vmem:[%s1 + $0x30] sm:$0xff]
    %v31 = vld [vmem:[%s1 + $0x38] sm:$0xff]
    %v32 = vld [vmem:[%s2] sm:$0xf]
    %v34 = vperm.slane %v32, 0
    %v35 = vperm.slane %v32, 1
    %v36 = vperm.slane %v32, 2
    %v37 = vperm.slane %v32, 3
    %v50 = vunpack.c.l.b16 %v24
    %v51 = vunpack.c.h.b16 %v24
    %v52 = vunpack.c.l.b16 %v25
    %v53 = vunpack.c.h.b16 %v25
    %v54 = vunpack.c.l.b16 %v26
    %v55 = vunpack.c.h.b16 %v26
    %v56 = vunpack.c.l.b16 %v27
    %v57 = vunpack.c.h.b16 %v27
    %v58 = vunpack.c.l.b16 %v28
    %v59 = vunpack.c.h.b16 %v28
    %v60 = vunpack.c.l.b16 %v29
    %v61 = vunpack.c.h.b16 %v29
    %v62 = vunpack.c.l.b16 %v30
    %v63 = vunpack.c.h.b16 %v30
    %v64 = vunpack.c.l.b16 %v31
    %v65 = vunpack.c.h.b16 %v31
    %v66 = vpack.c.b16 %v54, %v50
    %v67 = vpack.c.b16 %v55, %v51
    %v68 = vpack.c.b16 %v56, %v52
    %v69 = vpack.c.b16 %v57, %v53
    %v70 = vpack.c.b16 %v62, %v58
    %v71 = vpack.c.b16 %v63, %v59
    %v72 = vpack.c.b16 %v64, %v60
    %v73 = vpack.c.b16 %v65, %v61
    %vm82 = vcmask 261120
    %v84 = vsel %vm82, %v23, 0
    %86 = vmatpush.bf16.msra.mxu0 0
    %87 = vmatpush.bf16.msra.mxu0 0
    %88 = vmatpush.bf16.msra.mxu0 0
    %89 = vmatpush.bf16.msra.mxu0 0
    %90 = vmatpush.bf16.msra.mxu0 0
    %91 = vmatpush.bf16.msra.mxu0 0
    %92 = vmatpush.bf16.msra.mxu0 %v70
    %93 = vmatpush.bf16.msra.mxu0 %v66
    %94 = vmatmul.bf16.gmra.mxu0 %v84
    %v95 = vpop.f32.mrf.mxu0
    %v96 = vadd.f32 %v34, %v95
    %v97 = vpop.f32.mrf.mxu0
    %98 = vdwg.mxu0
    %99 = vmatpush.bf16.msra.mxu0 0
    %100 = vmatpush.bf16.msra.mxu0 0
    %101 = vmatpush.bf16.msra.mxu0 0
    %102 = vmatpush.bf16.msra.mxu0 0
    %103 = vmatpush.bf16.msra.mxu0 0
    %104 = vmatpush.bf16.msra.mxu0 0
    %105 = vmatpush.bf16.msra.mxu0 %v71
    %106 = vmatpush.bf16.msra.mxu0 %v67
    %107 = vmatmul.bf16.gmra.mxu0 %v84
    %v108 = vpop.f32.mrf.mxu0
    %v109 = vadd.f32 %v35, %v108
    %v110 = vpop.f32.mrf.mxu0
    %111 = vdwg.mxu0
    %112 = vmatpush.bf16.msra.mxu0 0
    %113 = vmatpush.bf16.msra.mxu0 0
    %114 = vmatpush.bf16.msra.mxu0 0
    %115 = vmatpush.bf16.msra.mxu0 0
    %116 = vmatpush.bf16.msra.mxu0 0
    %117 = vmatpush.bf16.msra.mxu0 0
    %118 = vmatpush.bf16.msra.mxu0 %v72
    %119 = vmatpush.bf16.msra.mxu0 %v68
    %120 = vmatmul.bf16.gmra.mxu0 %v84
    %v121 = vpop.f32.mrf.mxu0
    %v122 = vadd.f32 %v36, %v121
    %v123 = vpop.f32.mrf.mxu0
    %124 = vdwg.mxu0
    %125 = vmatpush.bf16.msra.mxu0 0
    %126 = vmatpush.bf16.msra.mxu0 0
    %127 = vmatpush.bf16.msra.mxu0 0
    %128 = vmatpush.bf16.msra.mxu0 0
    %129 = vmatpush.bf16.msra.mxu0 0
    %130 = vmatpush.bf16.msra.mxu0 0
    %131 = vmatpush.bf16.msra.mxu0 %v73
    %132 = vmatpush.bf16.msra.mxu0 %v69
    %133 = vmatmul.bf16.gmra.mxu0 %v84
    %v134 = vpop.f32.mrf.mxu0
    %v135 = vadd.f32 %v37, %v134
    %v136 = vpop.f32.mrf.mxu0
    %137 = vdwg.mxu0
    %v138 = vmax.f32 %v96, 0.0
    %v139 = vmax.f32 %v109, 0.0
    %v140 = vmax.f32 %v122, 0.0
    %v141 = vmax.f32 %v135, 0.0
    %v142 = vmin.f32 %v138, 6.0
    %v143 = vmin.f32 %v139, 6.0
    %v144 = vmin.f32 %v140, 6.0
    %v145 = vmin.f32 %v141, 6.0
    %v146 = vpack.c.bf16 %v142, %v142
    %v147 = vpack.c.bf16 %v143, %v143
    %v148 = vpack.c.bf16 %v144, %v144
    %v149 = vpack.c.bf16 %v145, %v145
    %v150 = vld [vmem:[%s3] sm:$0xf]
    %v151 = vld [vmem:[%s3 + $0x4] sm:$0xf]
    %v152 = vld [vmem:[%s3 + $0x8] sm:$0xf]
    %v153 = vld [vmem:[%s3 + $0xc] sm:$0xf]
    %v154 = vld [vmem:[%s3 + $0x10] sm:$0xf]
    %v155 = vld [vmem:[%s3 + $0x14] sm:$0xf]
    %v156 = vld [vmem:[%s3 + $0x18] sm:$0xf]
    %v157 = vld [vmem:[%s3 + $0x1c] sm:$0xf]
    %v158 = vld [vmem:[%s3 + $0x20] sm:$0xf]
    %v159 = vld [vmem:[%s3 + $0x24] sm:$0xf]
    %v160 = vld [vmem:[%s3 + $0x28] sm:$0xf]
    %v161 = vld [vmem:[%s3 + $0x2c] sm:$0xf]
    %v162 = vld [vmem:[%s3 + $0x30] sm:$0xf]
    %v163 = vld [vmem:[%s3 + $0x34] sm:$0xf]
    %v164 = vld [vmem:[%s3 + $0x38] sm:$0xf]
    %v165 = vld [vmem:[%s3 + $0x3c] sm:$0xf]
    %v166 = vld [vmem:[%s3 + $0x40] sm:$0xf]
    %v167 = vld [vmem:[%s3 + $0x44] sm:$0xf]
    %v168 = vld [vmem:[%s3 + $0x48] sm:$0xf]
    %v169 = vld [vmem:[%s3 + $0x4c] sm:$0xf]
    %v170 = vld [vmem:[%s3 + $0x50] sm:$0xf]
    %v171 = vld [vmem:[%s3 + $0x54] sm:$0xf]
    %v172 = vld [vmem:[%s3 + $0x58] sm:$0xf]
    %v173 = vld [vmem:[%s3 + $0x5c] sm:$0xf]
    %v174 = vld [vmem:[%s3 + $0x60] sm:$0xf]
    %v175 = vld [vmem:[%s3 + $0x64] sm:$0xf]
    %v176 = vld [vmem:[%s3 + $0x68] sm:$0xf]
    %v177 = vld [vmem:[%s3 + $0x6c] sm:$0xf]
    %v178 = vld [vmem:[%s3 + $0x70] sm:$0xf]
    %v179 = vld [vmem:[%s3 + $0x74] sm:$0xf]
    %v180 = vld [vmem:[%s3 + $0x78] sm:$0xf]
    %v181 = vld [vmem:[%s3 + $0x7c] sm:$0xf]
    %v182 = vld [vmem:[%s3 + $0x80] sm:$0xf]
    %v183 = vld [vmem:[%s3 + $0x84] sm:$0xf]
    %v184 = vld [vmem:[%s3 + $0x88] sm:$0xf]
    %v185 = vld [vmem:[%s3 + $0x8c] sm:$0xf]
    %v186 = vld [vmem:[%s3 + $0x90] sm:$0xf]
    %v187 = vld [vmem:[%s3 + $0x94] sm:$0xf]
    %v188 = vld [vmem:[%s3 + $0x98] sm:$0xf]
    %v189 = vld [vmem:[%s3 + $0x9c] sm:$0xf]
    %v190 = vld [vmem:[%s3 + $0xa0] sm:$0xf]
    %v191 = vld [vmem:[%s3 + $0xa4] sm:$0xf]
    %v192 = vld [vmem:[%s3 + $0xa8] sm:$0xf]
    %v193 = vld [vmem:[%s3 + $0xac] sm:$0xf]
    %v194 = vld [vmem:[%s3 + $0xb0] sm:$0xf]
    %v195 = vld [vmem:[%s3 + $0xb4] sm:$0xf]
    %v196 = vld [vmem:[%s3 + $0xb8] sm:$0xf]
    %v197 = vld [vmem:[%s3 + $0xbc] sm:$0xf]
    %v198 = vld [vmem:[%s3 + $0xc0] sm:$0xf]
    %v199 = vld [vmem:[%s3 + $0xc4] sm:$0xf]
    %v200 = vld [vmem:[%s3 + $0xc8] sm:$0xf]
    %v201 = vld [vmem:[%s3 + $0xcc] sm:$0xf]
    %v202 = vld [vmem:[%s3 + $0xd0] sm:$0xf]
    %v203 = vld [vmem:[%s3 + $0xd4] sm:$0xf]
    %v204 = vld [vmem:[%s3 + $0xd8] sm:$0xf]
    %v205 = vld [vmem:[%s3 + $0xdc] sm:$0xf]
    %v206 = vld [vmem:[%s3 + $0xe0] sm:$0xf]
    %v207 = vld [vmem:[%s3 + $0xe4] sm:$0xf]
    %v208 = vld [vmem:[%s3 + $0xe8] sm:$0xf]
    %v209 = vld [vmem:[%s3 + $0xec] sm:$0xf]
    %v210 = vld [vmem:[%s3 + $0xf0] sm:$0xf]
    %v211 = vld [vmem:[%s3 + $0xf4] sm:$0xf]
    %v212 = vld [vmem:[%s3 + $0xf8] sm:$0xf]
    %v213 = vld [vmem:[%s3 + $0xfc] sm:$0xf]
    %v214 = vld [vmem:[%s4] sm:$0x1]
    %v216 = vperm.slane %v214, 0
    %v282 = vunpack.c.l.b16 %v150
    %v283 = vunpack.c.l.b16 %v151
    %v284 = vunpack.c.l.b16 %v152
    %v285 = vunpack.c.l.b16 %v153
    %v286 = vunpack.c.l.b16 %v154
    %v287 = vunpack.c.l.b16 %v155
    %v288 = vunpack.c.l.b16 %v156
    %v289 = vunpack.c.l.b16 %v157
    %v290 = vunpack.c.l.b16 %v158
    %v291 = vunpack.c.l.b16 %v159
    %v292 = vunpack.c.l.b16 %v160
    %v293 = vunpack.c.l.b16 %v161
    %v294 = vunpack.c.l.b16 %v162
    %v295 = vunpack.c.l.b16 %v163
    %v296 = vunpack.c.l.b16 %v164
    %v297 = vunpack.c.l.b16 %v165
    %v298 = vunpack.c.l.b16 %v166
    %v299 = vunpack.c.l.b16 %v167
    %v300 = vunpack.c.l.b16 %v168
    %v301 = vunpack.c.l.b16 %v169
    %v302 = vunpack.c.l.b16 %v170
    %v303 = vunpack.c.l.b16 %v171
    %v304 = vunpack.c.l.b16 %v172
    %v305 = vunpack.c.l.b16 %v173
    %v306 = vunpack.c.l.b16 %v174
    %v307 = vunpack.c.l.b16 %v175
    %v308 = vunpack.c.l.b16 %v176
    %v309 = vunpack.c.l.b16 %v177
    %v310 = vunpack.c.l.b16 %v178
    %v311 = vunpack.c.l.b16 %v179
    %v312 = vunpack.c.l.b16 %v180
    %v313 = vunpack.c.l.b16 %v181
    %v314 = vunpack.c.l.b16 %v182
    %v315 = vunpack.c.l.b16 %v183
    %v316 = vunpack.c.l.b16 %v184
    %v317 = vunpack.c.l.b16 %v185
    %v318 = vunpack.c.l.b16 %v186
    %v319 = vunpack.c.l.b16 %v187
    %v320 = vunpack.c.l.b16 %v188
    %v321 = vunpack.c.l.b16 %v189
    %v322 = vunpack.c.l.b16 %v190
    %v323 = vunpack.c.l.b16 %v191
    %v324 = vunpack.c.l.b16 %v192
    %v325 = vunpack.c.l.b16 %v193
    %v326 = vunpack.c.l.b16 %v194
    %v327 = vunpack.c.l.b16 %v195
    %v328 = vunpack.c.l.b16 %v196
    %v329 = vunpack.c.l.b16 %v197
    %v330 = vunpack.c.l.b16 %v198
    %v331 = vunpack.c.l.b16 %v199
    %v332 = vunpack.c.l.b16 %v200
    %v333 = vunpack.c.l.b16 %v201
    %v334 = vunpack.c.l.b16 %v202
    %v335 = vunpack.c.l.b16 %v203
    %v336 = vunpack.c.l.b16 %v204
    %v337 = vunpack.c.l.b16 %v205
    %v338 = vunpack.c.l.b16 %v206
    %v339 = vunpack.c.l.b16 %v207
    %v340 = vunpack.c.l.b16 %v208
    %v341 = vunpack.c.l.b16 %v209
    %v342 = vunpack.c.l.b16 %v210
    %v343 = vunpack.c.l.b16 %v211
    %v344 = vunpack.c.l.b16 %v212
    %v345 = vunpack.c.l.b16 %v213
    %v346 = vpack.c.b16 %v283, %v282
    %v347 = vpack.c.b16 %v285, %v284
    %v348 = vpack.c.b16 %v287, %v286
    %v349 = vpack.c.b16 %v289, %v288
    %v350 = vpack.c.b16 %v291, %v290
    %v351 = vpack.c.b16 %v293, %v292
    %v352 = vpack.c.b16 %v295, %v294
    %v353 = vpack.c.b16 %v297, %v296
    %v354 = vpack.c.b16 %v299, %v298
    %v355 = vpack.c.b16 %v301, %v300
    %v356 = vpack.c.b16 %v303, %v302
    %v357 = vpack.c.b16 %v305, %v304
    %v358 = vpack.c.b16 %v307, %v306
    %v359 = vpack.c.b16 %v309, %v308
    %v360 = vpack.c.b16 %v311, %v310
    %v361 = vpack.c.b16 %v313, %v312
    %v362 = vpack.c.b16 %v315, %v314
    %v363 = vpack.c.b16 %v317, %v316
    %v364 = vpack.c.b16 %v319, %v318
    %v365 = vpack.c.b16 %v321, %v320
    %v366 = vpack.c.b16 %v323, %v322
    %v367 = vpack.c.b16 %v325, %v324
    %v368 = vpack.c.b16 %v327, %v326
    %v369 = vpack.c.b16 %v329, %v328
    %v370 = vpack.c.b16 %v331, %v330
    %v371 = vpack.c.b16 %v333, %v332
    %v372 = vpack.c.b16 %v335, %v334
    %v373 = vpack.c.b16 %v337, %v336
    %v374 = vpack.c.b16 %v339, %v338
    %v375 = vpack.c.b16 %v341, %v340
    %v376 = vpack.c.b16 %v343, %v342
    %v377 = vpack.c.b16 %v345, %v344
    %410 = vmatpush.bf16.msra.mxu0 %v353
    %411 = vmatpush.bf16.msra.mxu0 %v352
    %412 = vmatpush.bf16.msra.mxu0 %v351
    %413 = vmatpush.bf16.msra.mxu0 %v350
    %414 = vmatpush.bf16.msra.mxu0 %v349
    %415 = vmatpush.bf16.msra.mxu0 %v348
    %416 = vmatpush.bf16.msra.mxu0 %v347
    %417 = vmatpush.bf16.msra.mxu0 %v346
    %418 = vmatmul.bf16.gmra.mxu0 %v146
    %v419 = vpop.f32.mrf.mxu0
    %v420 = vadd.f32 %v216, %v419
    %v421 = vpop.f32.mrf.mxu0
    %422 = vdwg.mxu0
    %423 = vmatpush.bf16.msra.mxu0 %v361
    %424 = vmatpush.bf16.msra.mxu0 %v360
    %425 = vmatpush.bf16.msra.mxu0 %v359
    %426 = vmatpush.bf16.msra.mxu0 %v358
    %427 = vmatpush.bf16.msra.mxu0 %v357
    %428 = vmatpush.bf16.msra.mxu0 %v356
    %429 = vmatpush.bf16.msra.mxu0 %v355
    %430 = vmatpush.bf16.msra.mxu0 %v354
    %431 = vmatmul.bf16.gmra.mxu0 %v147
    %v432 = vpop.f32.mrf.mxu0
    %v433 = vadd.f32 %v420, %v432
    %v434 = vpop.f32.mrf.mxu0
    %435 = vdwg.mxu0
    %436 = vmatpush.bf16.msra.mxu0 %v369
    %437 = vmatpush.bf16.msra.mxu0 %v368
    %438 = vmatpush.bf16.msra.mxu0 %v367
    %439 = vmatpush.bf16.msra.mxu0 %v366
    %440 = vmatpush.bf16.msra.mxu0 %v365
    %441 = vmatpush.bf16.msra.mxu0 %v364
    %442 = vmatpush.bf16.msra.mxu0 %v363
    %443 = vmatpush.bf16.msra.mxu0 %v362
    %444 = vmatmul.bf16.gmra.mxu0 %v148
    %v445 = vpop.f32.mrf.mxu0
    %v446 = vadd.f32 %v433, %v445
    %v447 = vpop.f32.mrf.mxu0
    %448 = vdwg.mxu0
    %449 = vmatpush.bf16.msra.mxu0 %v377
    %450 = vmatpush.bf16.msra.mxu0 %v376
    %451 = vmatpush.bf16.msra.mxu0 %v375
    %452 = vmatpush.bf16.msra.mxu0 %v374
    %453 = vmatpush.bf16.msra.mxu0 %v373
    %454 = vmatpush.bf16.msra.mxu0 %v372
    %455 = vmatpush.bf16.msra.mxu0 %v371
    %456 = vmatpush.bf16.msra.mxu0 %v370
    %457 = vmatmul.bf16.gmra.mxu0 %v149
    %v458 = vpop.f32.mrf.mxu0
    %v459 = vadd.f32 %v446, %v458
    %v460 = vpop.f32.mrf.mxu0
    %461 = vdwg.mxu0
    %v462 = vmax.f32 %v459, 0.0
    %v463 = vmin.f32 %v462, 6.0
    %vm464 = vcmask 130048
    %465 = vst.msk [vmem:[#allocation2] sm:$0xff] %vm464, %v463
    // Predicated region
    $region22: #{tpu_custom_call.1} parent=1 // pred_check
      _
    $region23: #{tpu_custom_call.1} parent=1 // pred_check_branch
      %467 = sbr.rel (0) target = $region25
    $region24: #{tpu_custom_call.1} parent=1 // pred_region
      %469 = vsyncadd [#allocation3], 0
      %s471 = sshll.u32 [#allocation2], 4
      %s472 = int_to_ptr.vmem [resolvable:$true] %s471
      %s473 = sshll.u32 %s5, 4
      %s474 = int_to_ptr.hbm [resolvable:$true] %s473
      %476 = dma.vmem_to_hbm [thread:$0]  %s472, 128, %s474, [#allocation3]
    $region25: #{tpu_custom_call.1} parent=1 // pred_fallthru
      _
    // Predicated region
    $region26: #{tpu_custom_call.1} parent=1 // pred_check
      _
    $region27: #{tpu_custom_call.1} parent=1 // pred_check_branch
      %478 = sbr.rel (0) target = $region29
    $region28: #{tpu_custom_call.1} parent=1 // pred_region
      %480 = dma.done [#allocation3], 128
    $region29: #{tpu_custom_call.1} parent=1 // pred_fallthru
      _
    %481 = vsyncpa [#allocation3], 1

</llo_original>
